<compile_context>
chip_gen: v5e
topology: v5e:2x2
jax: 0.10.0
libtpu: 0.0.40
codegen_flags: <defaults>
</compile_context>

<pallas_src>
import functools

import jax
import jax.numpy as jnp
from jax.experimental import pallas as pl
from jax.experimental.pallas import tpu as pltpu


def _round_up(x, m):
    return ((x + m - 1) // m) * m


def _cdiv(a, b):
    return (a + b - 1) // b


# ---------------------------------------------------------------------------
# Kernel A: fused graph projection + GCN + conv_extend + re-projection/BN fold
# ---------------------------------------------------------------------------
def _proj_gcn_fold_kernel(x_ref, wsp_ref, bsp_ref, w1t_ref, b1_ref, w2_ref,
                          we_ref, scale_ref, shift_ref, a_ref, c_ref, acc_ref,
                          *, num_s, true_l, n_pad, normalize):
    l = pl.program_id(1)

    @pl.when(l == 0)
    def _():
        acc_ref[...] = jnp.zeros_like(acc_ref)

    xt = x_ref[0]                                                       # (C, LT)
    # single stacked projection per tile:  [xs; xp] = [Ws; Wp] @ x + [bs; bp]
    proj = jnp.dot(wsp_ref[...], xt, preferred_element_type=jnp.float32) + bsp_ref[...]
    xs = proj[:num_s]                                                   # (S, LT)
    xp = proj[num_s:]                                                   # (N, LT)

    # V += xs @ xp^T   (contract the LT lane dim of both operands on the MXU)
    acc_ref[...] += jax.lax.dot_general(
        xs, xp, dimension_numbers=(((1,), (1,)), ((), ())),
        preferred_element_type=jnp.float32)

    @pl.when(l == pl.num_programs(1) - 1)
    def _():
        v = acc_ref[...]                                                # (S, N)
        if n_pad:
            # zero-padded spatial columns contribute exactly n_pad * bs @ bp^T
            # (x = 0 there, so xs = bs and xp = bp) -- correct once at finalize.
            bs = bsp_ref[:num_s, :]
            bp_ = bsp_ref[num_s:, :]
            v = v - float(n_pad) * jnp.dot(bs, bp_.T,
                                           preferred_element_type=jnp.float32)
        if normalize:
            v = v * (1.0 / true_l)
        # GCN: conv1 mixes the node axis (+bias, +residual), relu,
        #      conv2 mixes the state axis (no bias)
        h = jnp.dot(v, w1t_ref[...], preferred_element_type=jnp.float32) \
            + b1_ref[...] + v
        h = jnp.maximum(h, 0.0)
        y = jnp.dot(w2_ref[...], h, preferred_element_type=jnp.float32)     # (S, N)
        # conv_extend (1x1x1, no bias): M = We @ y
        m = jnp.dot(we_ref[...], y, preferred_element_type=jnp.float32)     # (C, N)
        # fold re-projection and eval-mode BN:
        #   z = M @ (Wp x + bp)  =>  out = x + (scale*M@Wp) x + (scale*M@bp + shift)
        wp = wsp_ref[num_s:, :].astype(jnp.float32)                         # (N, C)
        bp_ = bsp_ref[num_s:, :]                                            # (N, 1)
        a_raw = jnp.dot(m, wp, preferred_element_type=jnp.float32)          # (C, C)
        c_raw = jnp.dot(m, bp_, preferred_element_type=jnp.float32)         # (C, 1)
        a_ref[0] = (scale_ref[...] * a_raw).astype(a_ref.dtype)
        c_ref[0] = (scale_ref[...] * c_raw + shift_ref[...]).astype(c_ref.dtype)


# ---------------------------------------------------------------------------
# Kernel C: re-projection + BatchNorm + residual with the folded (C, C) weight
#           out[b] = x[b] + A_fold[b] @ x[b] + c_fold[b]
# ---------------------------------------------------------------------------
def _reproject_kernel(x_ref, a_ref, c_ref, o_ref):
    xt = x_ref[0]                                                       # (C, LT)
    z = jnp.dot(a_ref[0], xt, preferred_element_type=jnp.float32)       # (C, LT)
    o_ref[0] = (xt.astype(jnp.float32) + z + c_ref[0]).astype(o_ref.dtype)


# ---------------------------------------------------------------------------
# Wrapper
# ---------------------------------------------------------------------------
def glore_unit(x, params, *, normalize=False, eps=1e-4, lt_max=None, mxu_dtype=None):
    """x: (B, C, D, H, W). params: dict of GloRe_Unit parameters.

    mxu_dtype: optional narrow dtype (e.g. jnp.bfloat16) for the x stream and the
    projection / folded weights fed to the MXU (accumulation and all elementwise
    math stay f32, so it is safe on v5e's f32-only VPU).  Default keeps f32.
    """
    B, C, D, H, W = x.shape
    L = D * H * W
    S = params["ws"].shape[0]
    N = params["wp"].shape[0]

    # ---- tile-size selection: lane-dense, VMEM- and traffic-aware -----------
    try:
        vmem_cap = int(pltpu.get_tpu_info().vmem_capacity_bytes)
    except Exception:                                    # not on TPU at trace time
        vmem_cap = 64 * 1024 * 1024                      # conservative (v7x-sized)
    item = 2 if mxu_dtype == jnp.bfloat16 else 4
    budget = vmem_cap // 2                               # headroom for residents etc.
    # kernel C keeps ~4 streaming (C, LT) tiles live (double-buffered in + out)
    lt_vmem = max(128, (budget // ((2 * item + 2 * 4) * C)) // 128 * 128)
    # target ~1 MiB per streamed tile so per-step pipeline overhead is amortized
    lt_traffic = max(512, min(8192, ((1 << 20) // (item * C)) // 128 * 128))
    lt_cap = min(lt_vmem, lt_traffic)
    if lt_max is not None:
        lt_cap = min(lt_cap, max(128, (lt_max // 128) * 128))

    l_pad128 = _round_up(L, 128)
    n_lt = _cdiv(l_pad128, min(lt_cap, l_pad128))
    lt = _round_up(_cdiv(l_pad128, n_lt), 128)           # balanced tiles, <= lt_cap
    l_pad = lt * n_lt
    n_pad = l_pad - L

    # ---- layout glue: flatten spatial dims, pad L only up to a multiple of LT
    xf = x.reshape(B, C, L)
    if mxu_dtype is not None and xf.dtype != mxu_dtype:
        xf = xf.astype(mxu_dtype)
    if n_pad:
        xf = jnp.pad(xf, ((0, 0), (0, 0), (0, n_pad)))

    # ---- parameter prep (stacking / transpose / 2-D lifting only)
    w_dtype = mxu_dtype if mxu_dtype is not None else jnp.float32
    wsp = jnp.concatenate([params["ws"], params["wp"]], axis=0).astype(w_dtype)   # (S+N, C)
    bsp = jnp.concatenate([params["bs"], params["bp"]], axis=0
                          ).reshape(S + N, 1).astype(jnp.float32)
    w1t = params["w1"].T.astype(jnp.float32)                                      # (N, N)
    b1 = params["b1"].reshape(1, N).astype(jnp.float32)
    w2 = params["w2"].astype(jnp.float32)                                         # (S, S)
    we = params["we"].astype(jnp.float32)                                         # (C, S)
    # TODO(synk): eval-mode BatchNorm (running stats); training-mode batch stats
    # would need an extra per-channel reduction pass over (B, L).
    scale_v = params["gamma"] / jnp.sqrt(params["var"] + eps)                     # (C,)
    shift_v = params["beta"] - params["mean"] * scale_v                           # (C,)
    scale = scale_v.reshape(C, 1).astype(jnp.float32)
    shift = shift_v.reshape(C, 1).astype(jnp.float32)

    vmem_needed = (2 * item + 2 * 4) * C * lt + 16 * C * C + (4 << 20)
    vmem_limit = int(min(vmem_cap * 3 // 4, max(32 << 20, vmem_needed)))

    # ---- kernel A: projection (accumulated over L) + GCN + extend + fold -----
    # TODO(synk): for B < 2 on v7x, split the L reduction into 2 parallel partial
    # accumulators so both TensorCores stay busy.
    a_fold, c_fold = pl.pallas_call(
        functools.partial(_proj_gcn_fold_kernel, num_s=S, true_l=L,
                          n_pad=n_pad, normalize=normalize),
        out_shape=(jax.ShapeDtypeStruct((B, C, C), w_dtype),
                   jax.ShapeDtypeStruct((B, C, 1), jnp.float32)),
        grid_spec=pltpu.PrefetchScalarGridSpec(
            num_scalar_prefetch=0,
            grid=(B, n_lt),
            in_specs=[
                pl.BlockSpec((1, C, lt), lambda b, l: (b, 0, l)),     # x tile (streamed)
                pl.BlockSpec((S + N, C), lambda b, l: (0, 0)),        # stacked Ws/Wp
                pl.BlockSpec((S + N, 1), lambda b, l: (0, 0)),        # stacked bs/bp
                pl.BlockSpec((N, N), lambda b, l: (0, 0)),            # W1^T
                pl.BlockSpec((1, N), lambda b, l: (0, 0)),            # b1
                pl.BlockSpec((S, S), lambda b, l: (0, 0)),            # W2
                pl.BlockSpec((C, S), lambda b, l: (0, 0)),            # We
                pl.BlockSpec((C, 1), lambda b, l: (0, 0)),            # BN scale
                pl.BlockSpec((C, 1), lambda b, l: (0, 0)),            # BN shift
            ],
            out_specs=(pl.BlockSpec((1, C, C), lambda b, l: (b, 0, 0)),
                       pl.BlockSpec((1, C, 1), lambda b, l: (b, 0, 0))),
            scratch_shapes=[pltpu.VMEM((S, N), jnp.float32)],
        ),
        compiler_params=pltpu.CompilerParams(
            dimension_semantics=("parallel", "arbitrary"),
            vmem_limit_bytes=vmem_limit),
    )(xf, wsp, bsp, w1t, b1, w2, we, scale, shift)

    # ---- kernel C: single-matmul re-projection + BN + residual ---------------
    out_flat = pl.pallas_call(
        _reproject_kernel,
        out_shape=jax.ShapeDtypeStruct((B, C, l_pad), x.dtype),
        grid_spec=pltpu.PrefetchScalarGridSpec(
            num_scalar_prefetch=0,
            grid=(B, n_lt),
            in_specs=[
                pl.BlockSpec((1, C, lt), lambda b, l: (b, 0, l)),     # x tile
                pl.BlockSpec((1, C, C), lambda b, l: (b, 0, 0)),      # folded weight
                pl.BlockSpec((1, C, 1), lambda b, l: (b, 0, 0)),      # folded shift
            ],
            out_specs=pl.BlockSpec((1, C, lt), lambda b, l: (b, 0, l)),
        ),
        compiler_params=pltpu.CompilerParams(
            dimension_semantics=("parallel", "parallel"),
            vmem_limit_bytes=vmem_limit),
    )(xf, a_fold, c_fold)

    if n_pad:
        out_flat = out_flat[:, :, :L]
    return out_flat.reshape(B, C, D, H, W)


# ---------------------------------------------------------------------------
# Pure-JAX reference mirroring the PyTorch forward (eval-mode BN)
# ---------------------------------------------------------------------------
def glore_unit_reference(x, params, *, normalize=False, eps=1e-4):
    B, C, D, H, W = x.shape
    L = D * H * W
    xf = x.reshape(B, C, L)
    xs = jnp.einsum("sc,bcl->bsl", params["ws"], xf) + params["bs"][None, :, None]
    xp = jnp.einsum("nc,bcl->bnl", params["wp"], xf) + params["bp"][None, :, None]
    v = jnp.einsum("bsl,bnl->bsn", xs, xp)
    if normalize:
        v = v / L
    h = jnp.einsum("bsi,ji->bsj", v, params["w1"]) + params["b1"][None, None, :] + v
    h = jnp.maximum(h, 0.0)
    y = jnp.einsum("ts,bsn->btn", params["w2"], h)
    xr = jnp.einsum("bsn,bnl->bsl", y, xp)
    z = jnp.einsum("cs,bsl->bcl", params["we"], xr)
    scale = params["gamma"] / jnp.sqrt(params["var"] + eps)
    shift = params["beta"] - params["mean"] * scale
    out = xf + scale[None, :, None] * z + shift[None, :, None]
    return out.reshape(B, C, D, H, W)


if __name__ == "__main__":
    B, num_in, num_mid = 2, 16, 8
    D, H, W = 3, 10, 14                      # L = 420 (not 128-aligned: pad correction path)
    S, N = 2 * num_mid, num_mid              # num_s = 16, num_n = 8

    key = jax.random.PRNGKey(0)
    keys = jax.random.split(key, 12)

    x = jax.random.normal(keys[0], (B, num_in, D, H, W), dtype=jnp.float32)

    def conv_w(k, out_c, in_c):
        bound = 1.0 / (in_c ** 0.5)
        return jax.random.uniform(k, (out_c, in_c), jnp.float32, -bound, bound)

    params = {
        # conv_state / conv_proj: 1x1x1 Conv3d -> (out, in) matrix + bias
        "ws": conv_w(keys[1], S, num_in),
        "bs": jax.random.uniform(keys[2], (S,), jnp.float32, -0.25, 0.25),
        "wp": conv_w(keys[3], N, num_in),
        "bp": jax.random.uniform(keys[4], (N,), jnp.float32, -0.25, 0.25),
        # GCN: conv1 (node axis, with bias), conv2 (state axis, no bias)
        "w1": conv_w(keys[5], N, N),
        "b1": jax.random.uniform(keys[6], (N,), jnp.float32, -0.35, 0.35),
        "w2": conv_w(keys[7], S, S),
        # conv_extend (no bias)
        "we": conv_w(keys[8], num_in, S),
        # blocker BatchNorm (eval-mode running stats), eps = 1e-4
        "gamma": jax.random.uniform(keys[9], (num_in,), jnp.float32, 0.5, 1.5),
        "beta": jax.random.uniform(keys[10], (num_in,), jnp.float32, -0.2, 0.2),
        "mean": 0.1 * jax.random.normal(keys[11], (num_in,), dtype=jnp.float32),
        "var": jnp.linspace(0.5, 1.5, num_in, dtype=jnp.float32),
    }

    ref = glore_unit_reference(x, params)

    # default (single large L tile per batch)
    out = jax.block_until_ready(glore_unit(x, params))
    assert out.shape == x.shape
    err = float(jnp.max(jnp.abs(out - ref)))
    assert jnp.allclose(out, ref, atol=1e-3, rtol=1e-3), f"default-tile mismatch: {err}"

    # force the multi-tile L-reduction path (lt=128, 4 tiles) to exercise the accumulator
    out2 = jax.block_until_ready(glore_unit(x, params, lt_max=128))
    err2 = float(jnp.max(jnp.abs(out2 - ref)))
    assert jnp.allclose(out2, ref, atol=1e-3, rtol=1e-3), f"multi-tile mismatch: {err2}"

    print("KERNEL_OK")
</pallas_src>

<mosaic_0001>
module attributes {stable_mosaic.version = 11 : i64} {
  func.func @_proj_gcn_fold_kernel(%arg0: i32, %arg1: i32, %arg2: memref<1x16x512xf32, #tpu.memory_space<vmem>>, %arg3: memref<24x16xf32, #tpu.memory_space<vmem>>, %arg4: memref<24x1xf32, #tpu.memory_space<vmem>>, %arg5: memref<8x8xf32, #tpu.memory_space<vmem>>, %arg6: memref<1x8xf32, #tpu.memory_space<vmem>>, %arg7: memref<16x16xf32, #tpu.memory_space<vmem>>, %arg8: memref<16x16xf32, #tpu.memory_space<vmem>>, %arg9: memref<16x1xf32, #tpu.memory_space<vmem>>, %arg10: memref<16x1xf32, #tpu.memory_space<vmem>>, %arg11: memref<1x16x16xf32, #tpu.memory_space<vmem>>, %arg12: memref<1x16x1xf32, #tpu.memory_space<vmem>>, %arg13: memref<16x8xf32, #tpu.memory_space<vmem>>) attributes {dimension_semantics = [#tpu.dimension_semantics<parallel>, #tpu.dimension_semantics<arbitrary>], iteration_bounds = array<i64: 2, 1>, scalar_prefetch = 0 : i64, scratch_operands = 1 : i64, tpu.core_type = #tpu.core_type<tc>, window_params = [{transform_indices = @transform_0, window_bounds = array<i64: 1, 16, 512>}, {pipeline_mode = #tpu.pipeline_mode<synchronous>, transform_indices = @transform_1, window_bounds = array<i64: 24, 16>}, {pipeline_mode = #tpu.pipeline_mode<synchronous>, transform_indices = @transform_2, window_bounds = array<i64: 24, 1>}, {pipeline_mode = #tpu.pipeline_mode<synchronous>, transform_indices = @transform_3, window_bounds = array<i64: 8, 8>}, {pipeline_mode = #tpu.pipeline_mode<synchronous>, transform_indices = @transform_4, window_bounds = array<i64: 1, 8>}, {pipeline_mode = #tpu.pipeline_mode<synchronous>, transform_indices = @transform_5, window_bounds = array<i64: 16, 16>}, {pipeline_mode = #tpu.pipeline_mode<synchronous>, transform_indices = @transform_6, window_bounds = array<i64: 16, 16>}, {pipeline_mode = #tpu.pipeline_mode<synchronous>, transform_indices = @transform_7, window_bounds = array<i64: 16, 1>}, {pipeline_mode = #tpu.pipeline_mode<synchronous>, transform_indices = @transform_8, window_bounds = array<i64: 16, 1>}, {transform_indices = @transform_9, window_bounds = array<i64: 1, 16, 16>}, {transform_indices = @transform_10, window_bounds = array<i64: 1, 16, 1>}]} {
    %c0_i32 = arith.constant 0 : i32
    %0 = arith.cmpi eq, %arg1, %c0_i32 : i32
    %1 = arith.extui %0 : i1 to i32
    %c0_i32_0 = arith.constant 0 : i32
    %2 = arith.cmpi ne, %1, %c0_i32_0 : i32
    scf.if %2 {
      %cst_14 = arith.constant 0.000000e+00 : f32
      %19 = vector.broadcast %cst_14 : f32 to vector<16x8xf32>
      %c0_15 = arith.constant 0 : index
      %c0_16 = arith.constant 0 : index
      %20 = vector.load %arg13[%c0_15, %c0_16] : memref<16x8xf32, #tpu.memory_space<vmem>>, vector<16x8xf32>
      tpu.vector_store %arg13[%c0_15, %c0_16], %19 {strides = array<i32>} : memref<16x8xf32, #tpu.memory_space<vmem>>, vector<16x8xf32>,
    } else {
    }
    %c0 = arith.constant 0 : index
    %c0_1 = arith.constant 0 : index
    %c0_2 = arith.constant 0 : index
    %3 = vector.load %arg2[%c0, %c0_1, %c0_2] : memref<1x16x512xf32, #tpu.memory_space<vmem>>, vector<1x16x512xf32>
    %4 = vector.shape_cast %3 : vector<1x16x512xf32> to vector<16x512xf32>
    %c0_3 = arith.constant 0 : index
    %c0_4 = arith.constant 0 : index
    %5 = vector.load %arg3[%c0_3, %c0_4] : memref<24x16xf32, #tpu.memory_space<vmem>>, vector<24x16xf32>
    %cst = arith.constant dense<0.000000e+00> : vector<24x512xf32>
    %6 = tpu.matmul %5, %4, %cst {dimension_numbers = #tpu.dot_dimension_numbers<[1], [0], [0], [1], [0, 0, 1, 1], [], []>} : vector<24x16xf32>, vector<16x512xf32>, vector<24x512xf32> -> vector<24x512xf32>
    %c0_5 = arith.constant 0 : index
    %c0_6 = arith.constant 0 : index
    %7 = vector.load %arg4[%c0_5, %c0_6] : memref<24x1xf32, #tpu.memory_space<vmem>>, vector<24x1xf32>
    %8 = vector.broadcast %7 : vector<24x1xf32> to vector<24x512xf32>
    %9 = arith.addf %6, %8 : vector<24x512xf32>
    %10 = vector.extract_strided_slice %9 {offsets = [0, 0], sizes = [16, 512], strides = [1, 1]} : vector<24x512xf32> to vector<16x512xf32>
    %11 = vector.extract_strided_slice %9 {offsets = [16, 0], sizes = [8, 512], strides = [1, 1]} : vector<24x512xf32> to vector<8x512xf32>
    %c0_7 = arith.constant 0 : index
    %c0_8 = arith.constant 0 : index
    %12 = vector.load %arg13[%c0_7, %c0_8] : memref<16x8xf32, #tpu.memory_space<vmem>>, vector<16x8xf32>
    %cst_9 = arith.constant dense<0.000000e+00> : vector<16x8xf32>
    %13 = tpu.matmul %10, %11, %cst_9 {dimension_numbers = #tpu.dot_dimension_numbers<[1], [1], [0], [0], [0, 0, 1, 0], [], []>} : vector<16x512xf32>, vector<8x512xf32>, vector<16x8xf32> -> vector<16x8xf32>
    %14 = arith.addf %12, %13 : vector<16x8xf32>
    %c0_10 = arith.constant 0 : index
    %c0_11 = arith.constant 0 : index
    %15 = vector.load %arg13[%c0_10, %c0_11] : memref<16x8xf32, #tpu.memory_space<vmem>>, vector<16x8xf32>
    tpu.vector_store %arg13[%c0_10, %c0_11], %14 {strides = array<i32>} : memref<16x8xf32, #tpu.memory_space<vmem>>, vector<16x8xf32>,
    %c0_i32_12 = arith.constant 0 : i32
    %16 = arith.cmpi eq, %arg1, %c0_i32_12 : i32
    %17 = arith.extui %16 : i1 to i32
    %c0_i32_13 = arith.constant 0 : i32
    %18 = arith.cmpi ne, %17, %c0_i32_13 : i32
    scf.if %18 {
      %c0_14 = arith.constant 0 : index
      %c0_15 = arith.constant 0 : index
      %19 = vector.load %arg13[%c0_14, %c0_15] : memref<16x8xf32, #tpu.memory_space<vmem>>, vector<16x8xf32>
      %c0_16 = arith.constant 0 : index
      %c0_17 = arith.constant 0 : index
      %20 = vector.load %arg4[%c0_16, %c0_17] : memref<24x1xf32, #tpu.memory_space<vmem>>, vector<16x1xf32>
      %c16 = arith.constant 16 : index
      %c0_18 = arith.constant 0 : index
      %21 = vector.load %arg4[%c16, %c0_18] : memref<24x1xf32, #tpu.memory_space<vmem>>, vector<8x1xf32>
      %22 = tpu.transpose %21, [1, 0] : vector<8x1xf32> -> vector<1x8xf32>
      %cst_19 = arith.constant dense<0.000000e+00> : vector<16x8xf32>
      %23 = tpu.matmul %20, %22, %cst_19 {dimension_numbers = #tpu.dot_dimension_numbers<[1], [0], [0], [1], [0, 0, 1, 1], [], []>} : vector<16x1xf32>, vector<1x8xf32>, vector<16x8xf32> -> vector<16x8xf32>
      %cst_20 = arith.constant 9.200000e+01 : f32
      %24 = vector.broadcast %cst_20 : f32 to vector<16x8xf32>
      %25 = arith.mulf %24, %23 : vector<16x8xf32>
      %26 = arith.subf %19, %25 : vector<16x8xf32>
      %c0_21 = arith.constant 0 : index
      %c0_22 = arith.constant 0 : index
      %27 = vector.load %arg5[%c0_21, %c0_22] : memref<8x8xf32, #tpu.memory_space<vmem>>, vector<8x8xf32>
      %cst_23 = arith.constant dense<0.000000e+00> : vector<16x8xf32>
      %28 = tpu.matmul %26, %27, %cst_23 {dimension_numbers = #tpu.dot_dimension_numbers<[1], [0], [0], [1], [0, 0, 1, 1], [], []>} : vector<16x8xf32>, vector<8x8xf32>, vector<16x8xf32> -> vector<16x8xf32>
      %c0_24 = arith.constant 0 : index
      %c0_25 = arith.constant 0 : index
      %29 = vector.load %arg6[%c0_24, %c0_25] : memref<1x8xf32, #tpu.memory_space<vmem>>, vector<1x8xf32>
      %30 = vector.broadcast %29 : vector<1x8xf32> to vector<16x8xf32>
      %31 = arith.addf %28, %30 : vector<16x8xf32>
      %32 = arith.addf %31, %26 : vector<16x8xf32>
      %cst_26 = arith.constant 0.000000e+00 : f32
      %33 = vector.broadcast %cst_26 : f32 to vector<16x8xf32>
      %34 = arith.maximumf %32, %33 : vector<16x8xf32>
      %c0_27 = arith.constant 0 : index
      %c0_28 = arith.constant 0 : index
      %35 = vector.load %arg7[%c0_27, %c0_28] : memref<16x16xf32, #tpu.memory_space<vmem>>, vector<16x16xf32>
      %cst_29 = arith.constant dense<0.000000e+00> : vector<16x8xf32>
      %36 = tpu.matmul %35, %34, %cst_29 {dimension_numbers = #tpu.dot_dimension_numbers<[1], [0], [0], [1], [0, 0, 1, 1], [], []>} : vector<16x16xf32>, vector<16x8xf32>, vector<16x8xf32> -> vector<16x8xf32>
      %c0_30 = arith.constant 0 : index
      %c0_31 = arith.constant 0 : index
      %37 = vector.load %arg8[%c0_30, %c0_31] : memref<16x16xf32, #tpu.memory_space<vmem>>, vector<16x16xf32>
      %cst_32 = arith.constant dense<0.000000e+00> : vector<16x8xf32>
      %38 = tpu.matmul %37, %36, %cst_32 {dimension_numbers = #tpu.dot_dimension_numbers<[1], [0], [0], [1], [0, 0, 1, 1], [], []>} : vector<16x16xf32>, vector<16x8xf32>, vector<16x8xf32> -> vector<16x8xf32>
      %c16_33 = arith.constant 16 : index
      %c0_34 = arith.constant 0 : index
      %39 = vector.load %arg3[%c16_33, %c0_34] : memref<24x16xf32, #tpu.memory_space<vmem>>, vector<8x16xf32>
      %c16_35 = arith.constant 16 : index
      %c0_36 = arith.constant 0 : index
      %40 = vector.load %arg4[%c16_35, %c0_36] : memref<24x1xf32, #tpu.memory_space<vmem>>, vector<8x1xf32>
      %cst_37 = arith.constant dense<0.000000e+00> : vector<16x16xf32>
      %41 = tpu.matmul %38, %39, %cst_37 {dimension_numbers = #tpu.dot_dimension_numbers<[1], [0], [0], [1], [0, 0, 1, 1], [], []>} : vector<16x8xf32>, vector<8x16xf32>, vector<16x16xf32> -> vector<16x16xf32>
      %cst_38 = arith.constant dense<0.000000e+00> : vector<16x1xf32>
      %42 = tpu.matmul %38, %40, %cst_38 {dimension_numbers = #tpu.dot_dimension_numbers<[1], [0], [0], [1], [0, 0, 1, 1], [], []>} : vector<16x8xf32>, vector<8x1xf32>, vector<16x1xf32> -> vector<16x1xf32>
      %c0_39 = arith.constant 0 : index
      %c0_40 = arith.constant 0 : index
      %43 = vector.load %arg9[%c0_39, %c0_40] : memref<16x1xf32, #tpu.memory_space<vmem>>, vector<16x1xf32>
      %44 = vector.broadcast %43 : vector<16x1xf32> to vector<16x16xf32>
      %45 = arith.mulf %44, %41 : vector<16x16xf32>
      %c0_41 = arith.constant 0 : index
      %c0_42 = arith.constant 0 : index
      %c0_43 = arith.constant 0 : index
      %46 = vector.load %arg11[%c0_41, %c0_42, %c0_43] : memref<1x16x16xf32, #tpu.memory_space<vmem>>, vector<1x16x16xf32>
      %47 = vector.shape_cast %46 : vector<1x16x16xf32> to vector<16x16xf32>
      %48 = vector.shape_cast %45 : vector<16x16xf32> to vector<1x16x16xf32>
      tpu.vector_store %arg11[%c0_41, %c0_42, %c0_43], %48 {strides = array<i32>} : memref<1x16x16xf32, #tpu.memory_space<vmem>>, vector<1x16x16xf32>,
      %c0_44 = arith.constant 0 : index
      %c0_45 = arith.constant 0 : index
      %49 = vector.load %arg9[%c0_44, %c0_45] : memref<16x1xf32, #tpu.memory_space<vmem>>, vector<16x1xf32>
      %50 = arith.mulf %49, %42 : vector<16x1xf32>
      %c0_46 = arith.constant 0 : index
      %c0_47 = arith.constant 0 : index
      %51 = vector.load %arg10[%c0_46, %c0_47] : memref<16x1xf32, #tpu.memory_space<vmem>>, vector<16x1xf32>
      %52 = arith.addf %50, %51 : vector<16x1xf32>
      %c0_48 = arith.constant 0 : index
      %c0_49 = arith.constant 0 : index
      %c0_50 = arith.constant 0 : index
      %53 = vector.load %arg12[%c0_48, %c0_49, %c0_50] : memref<1x16x1xf32, #tpu.memory_space<vmem>>, vector<1x16x1xf32>
      %54 = vector.shape_cast %53 : vector<1x16x1xf32> to vector<16x1xf32>
      %55 = vector.shape_cast %52 : vector<16x1xf32> to vector<1x16x1xf32>
      tpu.vector_store %arg12[%c0_48, %c0_49, %c0_50], %55 {strides = array<i32>} : memref<1x16x1xf32, #tpu.memory_space<vmem>>, vector<1x16x1xf32>,
    } else {
    }
    return
  }
  func.func @transform_0(%arg0: i32, %arg1: i32) -> (i32, i32, i32) {
    %c0_i32 = arith.constant 0 : i32
    %c0_i32_0 = arith.constant 0 : i32
    return %arg0, %c0_i32, %arg1 : i32, i32, i32
  }
  func.func @transform_1(%arg0: i32, %arg1: i32) -> (i32, i32) {
    %c0_i32 = arith.constant 0 : i32
    %c0_i32_0 = arith.constant 0 : i32
    %c0_i32_1 = arith.constant 0 : i32
    return %c0_i32, %c0_i32_0 : i32, i32
  }
  func.func @transform_2(%arg0: i32, %arg1: i32) -> (i32, i32) {
    %c0_i32 = arith.constant 0 : i32
    %c0_i32_0 = arith.constant 0 : i32
    %c0_i32_1 = arith.constant 0 : i32
    return %c0_i32, %c0_i32_0 : i32, i32
  }
  func.func @transform_3(%arg0: i32, %arg1: i32) -> (i32, i32) {
    %c0_i32 = arith.constant 0 : i32
    %c0_i32_0 = arith.constant 0 : i32
    %c0_i32_1 = arith.constant 0 : i32
    return %c0_i32, %c0_i32_0 : i32, i32
  }
  func.func @transform_4(%arg0: i32, %arg1: i32) -> (i32, i32) {
    %c0_i32 = arith.constant 0 : i32
    %c0_i32_0 = arith.constant 0 : i32
    %c0_i32_1 = arith.constant 0 : i32
    return %c0_i32, %c0_i32_0 : i32, i32
  }
  func.func @transform_5(%arg0: i32, %arg1: i32) -> (i32, i32) {
    %c0_i32 = arith.constant 0 : i32
    %c0_i32_0 = arith.constant 0 : i32
    %c0_i32_1 = arith.constant 0 : i32
    return %c0_i32, %c0_i32_0 : i32, i32
  }
  func.func @transform_6(%arg0: i32, %arg1: i32) -> (i32, i32) {
    %c0_i32 = arith.constant 0 : i32
    %c0_i32_0 = arith.constant 0 : i32
    %c0_i32_1 = arith.constant 0 : i32
    return %c0_i32, %c0_i32_0 : i32, i32
  }
  func.func @transform_7(%arg0: i32, %arg1: i32) -> (i32, i32) {
    %c0_i32 = arith.constant 0 : i32
    %c0_i32_0 = arith.constant 0 : i32
    %c0_i32_1 = arith.constant 0 : i32
    return %c0_i32, %c0_i32_0 : i32, i32
  }
  func.func @transform_8(%arg0: i32, %arg1: i32) -> (i32, i32) {
    %c0_i32 = arith.constant 0 : i32
    %c0_i32_0 = arith.constant 0 : i32
    %c0_i32_1 = arith.constant 0 : i32
    return %c0_i32, %c0_i32_0 : i32, i32
  }
  func.func @transform_9(%arg0: i32, %arg1: i32) -> (i32, i32, i32) {
    %c0_i32 = arith.constant 0 : i32
    %c0_i32_0 = arith.constant 0 : i32
    %c0_i32_1 = arith.constant 0 : i32
    return %arg0, %c0_i32, %c0_i32_0 : i32, i32, i32
  }
  func.func @transform_10(%arg0: i32, %arg1: i32) -> (i32, i32, i32) {
    %c0_i32 = arith.constant 0 : i32
    %c0_i32_0 = arith.constant 0 : i32
    %c0_i32_1 = arith.constant 0 : i32
    return %arg0, %c0_i32, %c0_i32_0 : i32, i32, i32
  }
}

</mosaic_0001>

<llo_original>
// kernel: tpu_custom_call.1
$region0: #{tpu_custom_call.1}
  #allocation0 [shape = 'u32[]', space=smem, size = 0x4, offset = 0x4, fixed_abs, tag = 'smem constant byte address 0x4 - core index']
  #allocation1 [shape = 'u32[72,128]{1,0:T(1,128)}', space=vmem, size = 0x9000, scoped, tag = 'internal scratch']
  #allocation2 [shape = 'f32[16,8]{1,0:T(8,128)}', space=vmem, size = 0x2000, scoped, tag = 'scratch operand']
  %s0 = inlined_call_operand.hbm [shape: f32[2,16,512], index: 0, kind: input, shape index: {}]
  %s1 = inlined_call_operand.vmem [shape: f32[24,16], index: 1, kind: input, shape index: {}]
  %s2 = inlined_call_operand.vmem [shape: f32[24,1], index: 2, kind: input, shape index: {}]
  %s3 = inlined_call_operand.vmem [shape: f32[8,8], index: 3, kind: input, shape index: {}]
  %s4 = inlined_call_operand.vmem [shape: f32[1,8], index: 4, kind: input, shape index: {}]
  %s5 = inlined_call_operand.vmem [shape: f32[16,16], index: 5, kind: input, shape index: {}]
  %s6 = inlined_call_operand.vmem [shape: f32[16,16], index: 6, kind: input, shape index: {}]
  %s7 = inlined_call_operand.vmem [shape: f32[16,1], index: 7, kind: input, shape index: {}]
  %s8 = inlined_call_operand.vmem [shape: f32[16,1], index: 8, kind: input, shape index: {}]
  %s9 = inlined_call_operand.hbm [shape: f32[2,16,16], index: 9, kind: output, shape index: {0}]
  %s10 = inlined_call_operand.vmem [shape: f32[2,16,1], index: 10, kind: output, shape index: {1}]
  %11 = xla_tuple %s9, %s10
  %s12 = sld [smem:[#allocation0]]
  $region89: #{tpu_custom_call.1} parent=0
    _
  %s14 = ssub.s32 1, %s12
  %s15 = scalar_select 0, %s14, %s12
  $region1: #{tpu_custom_call.1} parent=0
    #allocation3 [shape = 'u8[65536]{0}', space=vmem, size = 0x10000, scoped, tag = 'input window, operand 0']
    #allocation4 [shape = 's32[2]{0}', space=sflag, size = 0x8, scoped, tag = 'scoped memory for tpu_custom_call.1']
    #allocation5 [shape = 's32[2]{0}', space=sflag, size = 0x8, scoped, tag = 'scoped memory for tpu_custom_call.1']
    #allocation6 [shape = 'u8[16384]{0}', space=vmem, size = 0x4000, scoped, tag = 'output window, operand 0']
    %16 = vsyncpa [#allocation4], 0
    %s17 = scalar_lea.sflag [#allocation4], 1
    %18 = vsyncpa %s17, 0
    %19 = vsyncpa [#allocation5], 0
    %s20 = scalar_lea.sflag [#allocation5], 1
    %21 = vsyncpa %s20, 0
    loop: start=0, step=1, limit=4
    $region2: #{tpu_custom_call.1} parent=1 // loop_pre_header
      _
    $region3: #{tpu_custom_call.1} parent=1 // loop_header
      %s23 = sphi 0, %s27
      %p24 = scmp.ge.s32.totalorder %s23, 4
      %s30 = sphi 0, %s42
      %s31 = sphi 0, %s38
      %s32 = sphi 0, %s30
      %s33 = sphi 0, %s31
      %s34 = sphi 0, %s32
      %s35 = sphi 0, %s33
      %s47 = sphi 0, %s49
      %s50 = sphi 0, %s47
      %s51 = sphi 0, %s50
      %s67 = sphi 0, %s51
      %s71 = sphi 0, %s71
      %s73 = sphi 0, %s71
      %s74 = sphi 0, %s73
      %s88 = sphi 0, %s74
      %s92 = sphi 0, %s92
      %s94 = sphi 0, %s92
      %s95 = sphi 0, %s94
      %s109 = sphi 0, %s95
      %s113 = sphi 0, %s113
      %s115 = sphi 0, %s113
      %s116 = sphi 0, %s115
      %s130 = sphi 0, %s116
      %s134 = sphi 0, %s134
      %s136 = sphi 0, %s134
      %s137 = sphi 0, %s136
      %s151 = sphi 0, %s137
      %s155 = sphi 0, %s155
      %s157 = sphi 0, %s155
      %s158 = sphi 0, %s157
      %s172 = sphi 0, %s158
      %s176 = sphi 0, %s176
      %s178 = sphi 0, %s176
      %s179 = sphi 0, %s178
      %s193 = sphi 0, %s179
      %s197 = sphi 0, %s197
      %s199 = sphi 0, %s197
      %s200 = sphi 0, %s199
      %s214 = sphi 0, %s200
      %s218 = sphi 0, %s218
      %s220 = sphi 0, %s218
      %s221 = sphi 0, %s220
      %s235 = sphi 0, %s221
      %s241 = sphi 0, %s243
      %s244 = sphi 0, %s241
      %s245 = sphi 0, %s244
      %s261 = sphi 0, %s245
      %s267 = sphi 0, %s269
      %s270 = sphi 0, %s267
      %s271 = sphi 0, %s270
      %s287 = sphi 0, %s271
    $region4: #{tpu_custom_call.1} parent=1 // loop_header_branch
      %26 = sbr.rel (%p24) target = $region8
    $region5: #{tpu_custom_call.1} parent=1 // loop_body
      %s28 = ssub.s32 %s23, 1
      %s29 = ssub.s32 %s23, 2
      %s36 = sadd.s32 1, %s31
      %p37 = scmp.ge.s32.totalorder %s36, 1
      %s38 = scalar_select %p37, 0, %s36
      %s39 = sadd.s32 1, %s30
      %s40 = scalar_select %p37, %s39, %s30
      %p41 = scmp.ge.s32.totalorder %s40, 2
      %s42 = scalar_select %p41, 0, %s40
      %s43 = ssub.s32 %s30, %s42
      %s44 = ssub.s32 %s31, %s38
      %s45 = sor.u32 %s43, %s44
      %p46 = scmp.eq.s32.totalorder %s45, 0
      %s48 = sadd.s32 %s47, 1
      %s49 = scalar_select %p46, %s47, %s48
      %p52 = pneg %p46
      %p53 = scmp.eq.s32.totalorder %s23, 1
      %p54 = por %p52, %p53
      %p55 = scmp.ne.s32.totalorder %s47, %s50
      %p56 = scmp.eq.s32.totalorder %s23, 0
      %p57 = por %p55, %p56
      %p58 = scmp.ne.s32.totalorder %s47, %s50
      %p59 = scmp.eq.s32.totalorder %s28, 1
      %p60 = por %p58, %p59
      %p61 = scmp.ne.s32.totalorder %s50, %s51
      %p62 = scmp.eq.s32.totalorder %s28, 0
      %p63 = por %p61, %p62
      %p64 = scmp.ne.s32.totalorder %s50, %s51
      %p65 = scmp.eq.s32.totalorder %s29, 1
      %p66 = por %p64, %p65
      %p68 = scmp.ne.s32.totalorder %s51, %s67
      %p69 = scmp.eq.s32.totalorder %s29, 0
      %p70 = por %p68, %p69
      %s72 = sadd.s32 %s71, 1
      %p75 = scmp.eq.s32.totalorder %s23, 1
      %p76 = scmp.ne.s32.totalorder %s71, %s73
      %p77 = scmp.eq.s32.totalorder %s23, 0
      %p78 = por %p76, %p77
      %p79 = scmp.ne.s32.totalorder %s71, %s73
      %p80 = scmp.eq.s32.totalorder %s28, 1
      %p81 = por %p79, %p80
      %p82 = scmp.ne.s32.totalorder %s73, %s74
      %p83 = scmp.eq.s32.totalorder %s28, 0
      %p84 = por %p82, %p83
      %p85 = scmp.ne.s32.totalorder %s73, %s74
      %p86 = scmp.eq.s32.totalorder %s29, 1
      %p87 = por %p85, %p86
      %p89 = scmp.ne.s32.totalorder %s74, %s88
      %p90 = scmp.eq.s32.totalorder %s29, 0
      %p91 = por %p89, %p90
      %s93 = sadd.s32 %s92, 1
      %p96 = scmp.eq.s32.totalorder %s23, 1
      %p97 = scmp.ne.s32.totalorder %s92, %s94
      %p98 = scmp.eq.s32.totalorder %s23, 0
      %p99 = por %p97, %p98
      %p100 = scmp.ne.s32.totalorder %s92, %s94
      %p101 = scmp.eq.s32.totalorder %s28, 1
      %p102 = por %p100, %p101
      %p103 = scmp.ne.s32.totalorder %s94, %s95
      %p104 = scmp.eq.s32.totalorder %s28, 0
      %p105 = por %p103, %p104
      %p106 = scmp.ne.s32.totalorder %s94, %s95
      %p107 = scmp.eq.s32.totalorder %s29, 1
      %p108 = por %p106, %p107
      %p110 = scmp.ne.s32.totalorder %s95, %s109
      %p111 = scmp.eq.s32.totalorder %s29, 0
      %p112 = por %p110, %p111
      %s114 = sadd.s32 %s113, 1
      %p117 = scmp.eq.s32.totalorder %s23, 1
      %p118 = scmp.ne.s32.totalorder %s113, %s115
      %p119 = scmp.eq.s32.totalorder %s23, 0
      %p120 = por %p118, %p119
      %p121 = scmp.ne.s32.totalorder %s113, %s115
      %p122 = scmp.eq.s32.totalorder %s28, 1
      %p123 = por %p121, %p122
      %p124 = scmp.ne.s32.totalorder %s115, %s116
      %p125 = scmp.eq.s32.totalorder %s28, 0
      %p126 = por %p124, %p125
      %p127 = scmp.ne.s32.totalorder %s115, %s116
      %p128 = scmp.eq.s32.totalorder %s29, 1
      %p129 = por %p127, %p128
      %p131 = scmp.ne.s32.totalorder %s116, %s130
      %p132 = scmp.eq.s32.totalorder %s29, 0
      %p133 = por %p131, %p132
      %s135 = sadd.s32 %s134, 1
      %p138 = scmp.eq.s32.totalorder %s23, 1
      %p139 = scmp.ne.s32.totalorder %s134, %s136
      %p140 = scmp.eq.s32.totalorder %s23, 0
      %p141 = por %p139, %p140
      %p142 = scmp.ne.s32.totalorder %s134, %s136
      %p143 = scmp.eq.s32.totalorder %s28, 1
      %p144 = por %p142, %p143
      %p145 = scmp.ne.s32.totalorder %s136, %s137
      %p146 = scmp.eq.s32.totalorder %s28, 0
      %p147 = por %p145, %p146
      %p148 = scmp.ne.s32.totalorder %s136, %s137
      %p149 = scmp.eq.s32.totalorder %s29, 1
      %p150 = por %p148, %p149
      %p152 = scmp.ne.s32.totalorder %s137, %s151
      %p153 = scmp.eq.s32.totalorder %s29, 0
      %p154 = por %p152, %p153
      %s156 = sadd.s32 %s155, 1
      %p159 = scmp.eq.s32.totalorder %s23, 1
      %p160 = scmp.ne.s32.totalorder %s155, %s157
      %p161 = scmp.eq.s32.totalorder %s23, 0
      %p162 = por %p160, %p161
      %p163 = scmp.ne.s32.totalorder %s155, %s157
      %p164 = scmp.eq.s32.totalorder %s28, 1
      %p165 = por %p163, %p164
      %p166 = scmp.ne.s32.totalorder %s157, %s158
      %p167 = scmp.eq.s32.totalorder %s28, 0
      %p168 = por %p166, %p167
      %p169 = scmp.ne.s32.totalorder %s157, %s158
      %p170 = scmp.eq.s32.totalorder %s29, 1
      %p171 = por %p169, %p170
      %p173 = scmp.ne.s32.totalorder %s158, %s172
      %p174 = scmp.eq.s32.totalorder %s29, 0
      %p175 = por %p173, %p174
      %s177 = sadd.s32 %s176, 1
      %p180 = scmp.eq.s32.totalorder %s23, 1
      %p181 = scmp.ne.s32.totalorder %s176, %s178
      %p182 = scmp.eq.s32.totalorder %s23, 0
      %p183 = por %p181, %p182
      %p184 = scmp.ne.s32.totalorder %s176, %s178
      %p185 = scmp.eq.s32.totalorder %s28, 1
      %p186 = por %p184, %p185
      %p187 = scmp.ne.s32.totalorder %s178, %s179
      %p188 = scmp.eq.s32.totalorder %s28, 0
      %p189 = por %p187, %p188
      %p190 = scmp.ne.s32.totalorder %s178, %s179
      %p191 = scmp.eq.s32.totalorder %s29, 1
      %p192 = por %p190, %p191
      %p194 = scmp.ne.s32.totalorder %s179, %s193
      %p195 = scmp.eq.s32.totalorder %s29, 0
      %p196 = por %p194, %p195
      %s198 = sadd.s32 %s197, 1
      %p201 = scmp.eq.s32.totalorder %s23, 1
      %p202 = scmp.ne.s32.totalorder %s197, %s199
      %p203 = scmp.eq.s32.totalorder %s23, 0
      %p204 = por %p202, %p203
      %p205 = scmp.ne.s32.totalorder %s197, %s199
      %p206 = scmp.eq.s32.totalorder %s28, 1
      %p207 = por %p205, %p206
      %p208 = scmp.ne.s32.totalorder %s199, %s200
      %p209 = scmp.eq.s32.totalorder %s28, 0
      %p210 = por %p208, %p209
      %p211 = scmp.ne.s32.totalorder %s199, %s200
      %p212 = scmp.eq.s32.totalorder %s29, 1
      %p213 = por %p211, %p212
      %p215 = scmp.ne.s32.totalorder %s200, %s214
      %p216 = scmp.eq.s32.totalorder %s29, 0
      %p217 = por %p215, %p216
      %s219 = sadd.s32 %s218, 1
      %p222 = scmp.eq.s32.totalorder %s23, 1
      %p223 = scmp.ne.s32.totalorder %s218, %s220
      %p224 = scmp.eq.s32.totalorder %s23, 0
      %p225 = por %p223, %p224
      %p226 = scmp.ne.s32.totalorder %s218, %s220
      %p227 = scmp.eq.s32.totalorder %s28, 1
      %p228 = por %p226, %p227
      %p229 = scmp.ne.s32.totalorder %s220, %s221
      %p230 = scmp.eq.s32.totalorder %s28, 0
      %p231 = por %p229, %p230
      %p232 = scmp.ne.s32.totalorder %s220, %s221
      %p233 = scmp.eq.s32.totalorder %s29, 1
      %p234 = por %p232, %p233
      %p236 = scmp.ne.s32.totalorder %s221, %s235
      %p237 = scmp.eq.s32.totalorder %s29, 0
      %p238 = por %p236, %p237
      %s239 = ssub.s32 %s30, %s42
      %p240 = scmp.eq.s32.totalorder %s239, 0
      %s242 = sadd.s32 %s241, 1
      %s243 = scalar_select %p240, %s241, %s242
      %p246 = pneg %p240
      %p247 = scmp.eq.s32.totalorder %s23, 1
      %p248 = por %p246, %p247
      %p249 = scmp.ne.s32.totalorder %s241, %s244
      %p250 = scmp.eq.s32.totalorder %s23, 0
      %p251 = por %p249, %p250
      %p252 = scmp.ne.s32.totalorder %s241, %s244
      %p253 = scmp.eq.s32.totalorder %s28, 1
      %p254 = por %p252, %p253
      %p255 = scmp.ne.s32.totalorder %s244, %s245
      %p256 = scmp.eq.s32.totalorder %s28, 0
      %p257 = por %p255, %p256
      %p258 = scmp.ne.s32.totalorder %s244, %s245
      %p259 = scmp.eq.s32.totalorder %s29, 1
      %p260 = por %p258, %p259
      %p262 = scmp.ne.s32.totalorder %s245, %s261
      %p263 = scmp.eq.s32.totalorder %s29, 0
      %p264 = por %p262, %p263
      %s265 = ssub.s32 %s30, %s42
      %p266 = scmp.eq.s32.totalorder %s265, 0
      %s268 = sadd.s32 %s267, 1
      %s269 = scalar_select %p266, %s267, %s268
      %p272 = pneg %p266
      %p273 = scmp.eq.s32.totalorder %s23, 1
      %p274 = por %p272, %p273
      %p275 = scmp.ne.s32.totalorder %s267, %s270
      %p276 = scmp.eq.s32.totalorder %s23, 0
      %p277 = por %p275, %p276
      %p278 = scmp.ne.s32.totalorder %s267, %s270
      %p279 = scmp.eq.s32.totalorder %s28, 1
      %p280 = por %p278, %p279
      %p281 = scmp.ne.s32.totalorder %s270, %s271
      %p282 = scmp.eq.s32.totalorder %s28, 0
      %p283 = por %p281, %p282
      %p284 = scmp.ne.s32.totalorder %s270, %s271
      %p285 = scmp.eq.s32.totalorder %s29, 1
      %p286 = por %p284, %p285
      %p288 = scmp.ne.s32.totalorder %s271, %s287
      %p289 = scmp.eq.s32.totalorder %s29, 0
      %p290 = por %p288, %p289
      %p291 = scmp.le.s32.totalorder 1, %s23
      %p292 = scmp.lt.s32.totalorder %s23, 3
      %p293 = pnand %p291, %p292
      %p294 = pneg %p293
      // Predicated region
      $region9: #{tpu_custom_call.1} parent=5 // pred_check
        _
      $region10: #{tpu_custom_call.1} parent=5 // pred_check_branch
        %296 = sbr.rel (%p293) target = $region12
      $region11: #{tpu_custom_call.1} parent=5 // pred_region
        %s297 = ssub.s32 %s23, 1
        // Predicated region
        $region13: #{tpu_custom_call.1} parent=11 // pred_check
          %p298 = pneg %p84
        $region14: #{tpu_custom_call.1} parent=11 // pred_check_branch
          %300 = sbr.rel (%p298) target = $region16
        $region15: #{tpu_custom_call.1} parent=11 // pred_region
          _
        $region16: #{tpu_custom_call.1} parent=11 // pred_fallthru
          _
        // Predicated region
        $region17: #{tpu_custom_call.1} parent=11 // pred_check
          %p301 = pneg %p105
        $region18: #{tpu_custom_call.1} parent=11 // pred_check_branch
          %303 = sbr.rel (%p301) target = $region20
        $region19: #{tpu_custom_call.1} parent=11 // pred_region
          _
        $region20: #{tpu_custom_call.1} parent=11 // pred_fallthru
          _
        // Predicated region
        $region21: #{tpu_custom_call.1} parent=11 // pred_check
          %p304 = pneg %p126
        $region22: #{tpu_custom_call.1} parent=11 // pred_check_branch
          %306 = sbr.rel (%p304) target = $region24
        $region23: #{tpu_custom_call.1} parent=11 // pred_region
          _
        $region24: #{tpu_custom_call.1} parent=11 // pred_fallthru
          _
        // Predicated region
        $region25: #{tpu_custom_call.1} parent=11 // pred_check
          %p307 = pneg %p147
        $region26: #{tpu_custom_call.1} parent=11 // pred_check_branch
          %309 = sbr.rel (%p307) target = $region28
        $region27: #{tpu_custom_call.1} parent=11 // pred_region
          _
        $region28: #{tpu_custom_call.1} parent=11 // pred_fallthru
          _
        // Predicated region
        $region29: #{tpu_custom_call.1} parent=11 // pred_check
          %p310 = pneg %p168
        $region30: #{tpu_custom_call.1} parent=11 // pred_check_branch
          %312 = sbr.rel (%p310) target = $region32
        $region31: #{tpu_custom_call.1} parent=11 // pred_region
          _
        $region32: #{tpu_custom_call.1} parent=11 // pred_fallthru
          _
        // Predicated region
        $region33: #{tpu_custom_call.1} parent=11 // pred_check
          %p313 = pneg %p189
        $region34: #{tpu_custom_call.1} parent=11 // pred_check_branch
          %315 = sbr.rel (%p313) target = $region36
        $region35: #{tpu_custom_call.1} parent=11 // pred_region
          _
        $region36: #{tpu_custom_call.1} parent=11 // pred_fallthru
          _
        // Predicated region
        $region37: #{tpu_custom_call.1} parent=11 // pred_check
          %p316 = pneg %p210
        $region38: #{tpu_custom_call.1} parent=11 // pred_check_branch
          %318 = sbr.rel (%p316) target = $region40
        $region39: #{tpu_custom_call.1} parent=11 // pred_region
          _
        $region40: #{tpu_custom_call.1} parent=11 // pred_fallthru
          _
        // Predicated region
        $region41: #{tpu_custom_call.1} parent=11 // pred_check
          %p319 = pneg %p231
        $region42: #{tpu_custom_call.1} parent=11 // pred_check_branch
          %321 = sbr.rel (%p319) target = $region44
        $region43: #{tpu_custom_call.1} parent=11 // pred_region
          _
        $region44: #{tpu_custom_call.1} parent=11 // pred_fallthru
          _
      $region12: #{tpu_custom_call.1} parent=5 // pred_fallthru
        _
      %p322 = scmp.lt.s32.totalorder %s23, 2
      // Predicated region
      $region45: #{tpu_custom_call.1} parent=5 // pred_check
        %p323 = pneg %p322
      $region46: #{tpu_custom_call.1} parent=5 // pred_check_branch
        %325 = sbr.rel (%p323) target = $region48
      $region47: #{tpu_custom_call.1} parent=5 // pred_region
        // Predicated region
        $region49: #{tpu_custom_call.1} parent=47 // pred_check
          %p326 = pneg %p57
        $region50: #{tpu_custom_call.1} parent=47 // pred_check_branch
          %328 = sbr.rel (%p326) target = $region52
        $region51: #{tpu_custom_call.1} parent=47 // pred_region
          %s329 = sand.u32 %s47, 1
          %s330 = scalar_lea.sflag [#allocation4], %s329
          %s331 = sand.u32 %s47, 1
          %s332 = smul.addr %s331, 64
          %s333 = scalar_lea.vmem [#allocation3], %s332
          %s334 = smul.u32 4, %s31
          %336 = vsyncadd %s330, 0
          %s337 = smul.addr %s30, 8
          %s338 = sadd.s32 %s334, %s337
          %s339 = smul.addr %s338, 8
          %s340 = scalar_lea.hbm %s0, %s339
          %s341 = sshll.u32 %s340, 4
          %s342 = int_to_ptr.hbm [resolvable:$true] %s341
          %s343 = sshll.u32 %s333, 4
          %s344 = int_to_ptr.vmem [resolvable:$true] %s343
          %349 = dma.hbm_to_vmem [thread:$0]  %s342, 1024, %s344, %s330, 512, 512, 32
        $region52: #{tpu_custom_call.1} parent=47 // pred_fallthru
          _
      $region48: #{tpu_custom_call.1} parent=5 // pred_fallthru
        _
      %p350 = scmp.le.s32.totalorder 1, %s23
      %p351 = scmp.lt.s32.totalorder %s23, 3
      %p352 = pnand %p350, %p351
      %p353 = pneg %p352
      // Predicated region
      $region53: #{tpu_custom_call.1} parent=5 // pred_check
        _
      $region54: #{tpu_custom_call.1} parent=5 // pred_check_branch
        %355 = sbr.rel (%p352) target = $region56
      $region55: #{tpu_custom_call.1} parent=5 // pred_region
        %s356 = ssub.s32 %s23, 1
        %s357 = sand.u32 %s50, 1
        %s358 = scalar_lea.sflag [#allocation4], %s357
        %s359 = sand.u32 %s50, 1
        %s360 = smul.addr %s359, 64
        %s361 = scalar_lea.vmem [#allocation3], %s360
        // Predicated region
        $region57: #{tpu_custom_call.1} parent=55 // pred_check
          %p362 = pneg %p63
        $region58: #{tpu_custom_call.1} parent=55 // pred_check_branch
          %364 = sbr.rel (%p362) target = $region60
        $region59: #{tpu_custom_call.1} parent=55 // pred_region
          %366 = dma.done %s358, 1024
        $region60: #{tpu_custom_call.1} parent=55 // pred_fallthru
          _
        %s367 = sand.u32 %s50, 1
        %s368 = scalar_lea.sflag [#allocation4], %s367
        %s369 = sand.u32 %s50, 1
        %s370 = smul.addr %s369, 64
        %s371 = scalar_lea.vmem [#allocation3], %s370
        %p372 = pneg %p63
        %p373 = pneg %p60
        %p374 = pneg %p84
        %p375 = pneg %p81
        %p376 = pneg %p105
        %p377 = pneg %p102
        %p378 = pneg %p126
        %p379 = pneg %p123
        %p380 = pneg %p147
        %p381 = pneg %p144
        %p382 = pneg %p168
        %p383 = pneg %p165
        %p384 = pneg %p189
        %p385 = pneg %p186
        %p386 = pneg %p210
        %p387 = pneg %p207
        %p388 = pneg %p231
        %p389 = pneg %p228
        %p390 = pneg %p257
        %p391 = pneg %p254
        %s392 = sand.u32 %s244, 1
        %s393 = scalar_lea.sflag [#allocation5], %s392
        %s394 = sand.u32 %s244, 1
        %s395 = smul.addr %s394, 16
        %s396 = scalar_lea.vmem [#allocation6], %s395
        %p397 = pneg %p283
        %p398 = pneg %p280
        %p399 = scmp.lt.s32.totalorder %s32, 1
        %s400 = scalar_select %p399, %s32, 1
        %s401 = smul.addr %s400, 2
        %s402 = smul.addr %s401, 8
        %s403 = scalar_lea.vmem %s10, %s402
        %s404 = smul.u32 4, %s33
        %p405 = scmp.lt.s32.totalorder %s32, 1
        %s406 = scalar_select %p405, %s32, 1
        %s407 = smul.addr %s406, 2
        %s408 = smul.addr %s407, 8
        %s409 = scalar_lea.vmem %s10, %s408
        %p410 = scmp.eq.s32.totalorder %s33, 0
        // Predicated region
        $region61: #{tpu_custom_call.1} parent=55 // pred_check
          %p411 = pneg %p410
        $region62: #{tpu_custom_call.1} parent=55 // pred_check_branch
          %413 = sbr.rel (%p411) target = $region64
        $region63: #{tpu_custom_call.1} parent=55 // pred_region
          %vm414 = vcmask 64512
          %415 = vst.msk [vmem:[#allocation2] sm:$0xff] %vm414, 0.0
          %416 = vst.msk [vmem:[#allocation2 + $0x8] sm:$0xff] %vm414, 0.0
        $region64: #{tpu_custom_call.1} parent=55 // pred_fallthru
          _
        %v417 = vld [vmem:[%s361] sm:$0xff]
        %v418 = vld [vmem:[%s361 + $0x8] sm:$0xff]
        %v419 = vld [vmem:[%s361 + $0x10] sm:$0xff]
        %v420 = vld [vmem:[%s361 + $0x18] sm:$0xff]
        %v421 = vld [vmem:[%s361 + $0x20] sm:$0xff]
        %v422 = vld [vmem:[%s361 + $0x28] sm:$0xff]
        %v423 = vld [vmem:[%s361 + $0x30] sm:$0xff]
        %v424 = vld [vmem:[%s361 + $0x38] sm:$0xff]
        %v425 = vld [vmem:[%s1] sm:$0xff]
        %v426 = vld [vmem:[%s1 + $0x8] sm:$0xff]
        %v427 = vld [vmem:[%s1 + $0x10] sm:$0xff]
        %v428 = vld [vmem:[%s2] sm:$0xff]
        %v429 = vld [vmem:[%s2 + $0x8] sm:$0xff]
        %v430 = vld [vmem:[%s2 + $0x10] sm:$0xff]
        %432 = vset.pattern.permute.xlu0 0
        %433 = vperm.xlu0 %432, %v428
        %v434 = vpop.permute.xlu0 %433
        %437 = vset.pattern.permute.xlu0 0
        %438 = vperm.xlu0 %437, %v429
        %v439 = vpop.permute.xlu0 %438
        %442 = vset.pattern.permute.xlu0 0
        %443 = vperm.xlu0 %442, %v430
        %v444 = vpop.permute.xlu0 %443
        %vm446 = vcmask 130048
        %v448 = vsel %vm446, %v425, 0
        %v451 = vsel %vm446, %v426, 0
        %v454 = vsel %vm446, %v427, 0
        %456 = vmatpush.msra.mxu0 0.0
        %457 = vmatpush.msra.mxu0 0.0
        %458 = vmatpush.msra.mxu0 0.0
        %459 = vmatpush.msra.mxu0 0.0
        %460 = vmatpush.msra.mxu0 0.0
        %461 = vmatpush.msra.mxu0 0.0
        %462 = vmatpush.msra.mxu0 0.0
        %463 = vmatpush.msra.mxu0 0.0
        %464 = vmatpush.msra.mxu0 0.0
        %465 = vmatpush.msra.mxu0 0.0
        %466 = vmatpush.msra.mxu0 0.0
        %467 = vmatpush.msra.mxu0 0.0
        %468 = vmatpush.msra.mxu0 0.0
        %469 = vmatpush.msra.mxu0 0.0
        %470 = vmatpush.msra.mxu0 %v421
        %471 = vmatpush.msra.mxu0 %v417
        %472 = vmatmul.f32.gmra.mxu0 %v448
        %v473 = vpop.f32.mrf.mxu0
        %v474 = vadd.f32 %v434, %v473
        %475 = vmatmul.f32.gmra.mxu0 %v451
        %v476 = vpop.f32.mrf.mxu0
        %v477 = vadd.f32 %v439, %v476
        %478 = vmatmul.f32.gmra.mxu0 %v454
        %v479 = vpop.f32.mrf.mxu0
        %v480 = vadd.f32 %v444, %v479
        %481 = vdwg.mxu0
        %482 = vmatpush.msra.mxu0 0.0
        %483 = vmatpush.msra.mxu0 0.0
        %484 = vmatpush.msra.mxu0 0.0
        %485 = vmatpush.msra.mxu0 0.0
        %486 = vmatpush.msra.mxu0 0.0
        %487 = vmatpush.msra.mxu0 0.0
        %488 = vmatpush.msra.mxu0 0.0
        %489 = vmatpush.msra.mxu0 0.0
        %490 = vmatpush.msra.mxu0 0.0
        %491 = vmatpush.msra.mxu0 0.0
        %492 = vmatpush.msra.mxu0 0.0
        %493 = vmatpush.msra.mxu0 0.0
        %494 = vmatpush.msra.mxu0 0.0
        %495 = vmatpush.msra.mxu0 0.0
        %496 = vmatpush.msra.mxu0 %v422
        %497 = vmatpush.msra.mxu0 %v418
        %498 = vmatmul.f32.gmra.mxu0 %v448
        %v499 = vpop.f32.mrf.mxu0
        %v500 = vadd.f32 %v434, %v499
        %501 = vmatmul.f32.gmra.mxu0 %v451
        %v502 = vpop.f32.mrf.mxu0
        %v503 = vadd.f32 %v439, %v502
        %504 = vmatmul.f32.gmra.mxu0 %v454
        %v505 = vpop.f32.mrf.mxu0
        %v506 = vadd.f32 %v444, %v505
        %507 = vdwg.mxu0
        %508 = vmatpush.msra.mxu0 0.0
        %509 = vmatpush.msra.mxu0 0.0
        %510 = vmatpush.msra.mxu0 0.0
        %511 = vmatpush.msra.mxu0 0.0
        %512 = vmatpush.msra.mxu0 0.0
        %513 = vmatpush.msra.mxu0 0.0
        %514 = vmatpush.msra.mxu0 0.0
        %515 = vmatpush.msra.mxu0 0.0
        %516 = vmatpush.msra.mxu0 0.0
        %517 = vmatpush.msra.mxu0 0.0
        %518 = vmatpush.msra.mxu0 0.0
        %519 = vmatpush.msra.mxu0 0.0
        %520 = vmatpush.msra.mxu0 0.0
        %521 = vmatpush.msra.mxu0 0.0
        %522 = vmatpush.msra.mxu0 %v423
        %523 = vmatpush.msra.mxu0 %v419
        %524 = vmatmul.f32.gmra.mxu0 %v448
        %v525 = vpop.f32.mrf.mxu0
        %v526 = vadd.f32 %v434, %v525
        %527 = vmatmul.f32.gmra.mxu0 %v451
        %v528 = vpop.f32.mrf.mxu0
        %v529 = vadd.f32 %v439, %v528
        %530 = vmatmul.f32.gmra.mxu0 %v454
        %v531 = vpop.f32.mrf.mxu0
        %v532 = vadd.f32 %v444, %v531
        %533 = vdwg.mxu0
        %534 = vmatpush.msra.mxu0 0.0
        %535 = vmatpush.msra.mxu0 0.0
        %536 = vmatpush.msra.mxu0 0.0
        %537 = vmatpush.msra.mxu0 0.0
        %538 = vmatpush.msra.mxu0 0.0
        %539 = vmatpush.msra.mxu0 0.0
        %540 = vmatpush.msra.mxu0 0.0
        %541 = vmatpush.msra.mxu0 0.0
        %542 = vmatpush.msra.mxu0 0.0
        %543 = vmatpush.msra.mxu0 0.0
        %544 = vmatpush.msra.mxu0 0.0
        %545 = vmatpush.msra.mxu0 0.0
        %546 = vmatpush.msra.mxu0 0.0
        %547 = vmatpush.msra.mxu0 0.0
        %548 = vmatpush.msra.mxu0 %v424
        %549 = vmatpush.msra.mxu0 %v420
        %550 = vmatmul.f32.gmra.mxu0 %v448
        %v551 = vpop.f32.mrf.mxu0
        %v552 = vadd.f32 %v434, %v551
        %553 = vmatmul.f32.gmra.mxu0 %v451
        %v554 = vpop.f32.mrf.mxu0
        %v555 = vadd.f32 %v439, %v554
        %556 = vmatmul.f32.gmra.mxu0 %v454
        %v557 = vpop.f32.mrf.mxu0
        %v558 = vadd.f32 %v444, %v557
        %559 = vdwg.mxu0
        %v560 = vld [vmem:[#allocation2] sm:$0xff]
        %v561 = vld [vmem:[#allocation2 + $0x8] sm:$0xff]
        %562 = vmatpush.xpose.msra.mxu0 0.0
        %563 = vmatpush.xpose.msra.mxu0 0.0
        %564 = vmatpush.xpose.msra.mxu0 0.0
        %565 = vmatpush.xpose.msra.mxu0 0.0
        %566 = vmatpush.xpose.msra.mxu0 0.0
        %567 = vmatpush.xpose.msra.mxu0 0.0
        %568 = vmatpush.xpose.msra.mxu0 0.0
        %569 = vmatpush.xpose.msra.mxu0 0.0
        %570 = vmatpush.xpose.msra.mxu0 0.0
        %571 = vmatpush.xpose.msra.mxu0 0.0
        %572 = vmatpush.xpose.msra.mxu0 0.0
        %573 = vmatpush.xpose.msra.mxu0 0.0
        %574 = vmatpush.xpose.msra.mxu0 0.0
        %575 = vmatpush.xpose.msra.mxu0 0.0
        %576 = vmatpush.xpose.msra.mxu0 0.0
        %577 = vmatpush.xpose.msra.mxu0 %v480
        %578 = vmatmul.f32.gmra.mxu0 %v474
        %v579 = vpop.f32.mrf.mxu0
        %v580 = vadd.f32 0.0, %v579
        %581 = vmatmul.f32.gmra.mxu0 %v477
        %v582 = vpop.f32.mrf.mxu0
        %v583 = vadd.f32 0.0, %v582
        %584 = vdwg.mxu0
        %585 = vmatpush.xpose.msra.mxu0 0.0
        %586 = vmatpush.xpose.msra.mxu0 0.0
        %587 = vmatpush.xpose.msra.mxu0 0.0
        %588 = vmatpush.xpose.msra.mxu0 0.0
        %589 = vmatpush.xpose.msra.mxu0 0.0
        %590 = vmatpush.xpose.msra.mxu0 0.0
        %591 = vmatpush.xpose.msra.mxu0 0.0
        %592 = vmatpush.xpose.msra.mxu0 0.0
        %593 = vmatpush.xpose.msra.mxu0 0.0
        %594 = vmatpush.xpose.msra.mxu0 0.0
        %595 = vmatpush.xpose.msra.mxu0 0.0
        %596 = vmatpush.xpose.msra.mxu0 0.0
        %597 = vmatpush.xpose.msra.mxu0 0.0
        %598 = vmatpush.xpose.msra.mxu0 0.0
        %599 = vmatpush.xpose.msra.mxu0 0.0
        %600 = vmatpush.xpose.msra.mxu0 %v506
        %601 = vmatmul.f32.gmra.mxu0 %v500
        %v602 = vpop.f32.mrf.mxu0
        %v603 = vadd.f32 %v580, %v602
        %604 = vmatmul.f32.gmra.mxu0 %v503
        %v605 = vpop.f32.mrf.mxu0
        %v606 = vadd.f32 %v583, %v605
        %607 = vdwg.mxu0
        %608 = vmatpush.xpose.msra.mxu0 0.0
        %609 = vmatpush.xpose.msra.mxu0 0.0
        %610 = vmatpush.xpose.msra.mxu0 0.0
        %611 = vmatpush.xpose.msra.mxu0 0.0
        %612 = vmatpush.xpose.msra.mxu0 0.0
        %613 = vmatpush.xpose.msra.mxu0 0.0
        %614 = vmatpush.xpose.msra.mxu0 0.0
        %615 = vmatpush.xpose.msra.mxu0 0.0
        %616 = vmatpush.xpose.msra.mxu0 0.0
        %617 = vmatpush.xpose.msra.mxu0 0.0
        %618 = vmatpush.xpose.msra.mxu0 0.0
        %619 = vmatpush.xpose.msra.mxu0 0.0
        %620 = vmatpush.xpose.msra.mxu0 0.0
        %621 = vmatpush.xpose.msra.mxu0 0.0
        %622 = vmatpush.xpose.msra.mxu0 0.0
        %623 = vmatpush.xpose.msra.mxu0 %v532
        %624 = vmatmul.f32.gmra.mxu0 %v526
        %v625 = vpop.f32.mrf.mxu0
        %v626 = vadd.f32 %v603, %v625
        %627 = vmatmul.f32.gmra.mxu0 %v529
        %v628 = vpop.f32.mrf.mxu0
        %v629 = vadd.f32 %v606, %v628
        %630 = vdwg.mxu0
        %631 = vmatpush.xpose.msra.mxu0 0.0
        %632 = vmatpush.xpose.msra.mxu0 0.0
        %633 = vmatpush.xpose.msra.mxu0 0.0
        %634 = vmatpush.xpose.msra.mxu0 0.0
        %635 = vmatpush.xpose.msra.mxu0 0.0
        %636 = vmatpush.xpose.msra.mxu0 0.0
        %637 = vmatpush.xpose.msra.mxu0 0.0
        %638 = vmatpush.xpose.msra.mxu0 0.0
        %639 = vmatpush.xpose.msra.mxu0 0.0
        %640 = vmatpush.xpose.msra.mxu0 0.0
        %641 = vmatpush.xpose.msra.mxu0 0.0
        %642 = vmatpush.xpose.msra.mxu0 0.0
        %643 = vmatpush.xpose.msra.mxu0 0.0
        %644 = vmatpush.xpose.msra.mxu0 0.0
        %645 = vmatpush.xpose.msra.mxu0 0.0
        %646 = vmatpush.xpose.msra.mxu0 %v558
        %647 = vmatmul.f32.gmra.mxu0 %v552
        %v648 = vpop.f32.mrf.mxu0
        %v649 = vadd.f32 %v626, %v648
        %650 = vmatmul.f32.gmra.mxu0 %v555
        %v651 = vpop.f32.mrf.mxu0
        %v652 = vadd.f32 %v629, %v651
        %653 = vdwg.mxu0
        %v654 = vadd.f32 %v560, %v649
        %v655 = vadd.f32 %v561, %v652
        %vm656 = vcmask 64512
        %657 = vst.msk [vmem:[#allocation2] sm:$0xff] %vm656, %v654
        %658 = vst.msk [vmem:[#allocation2 + $0x8] sm:$0xff] %vm656, %v655
        // Predicated region
        $region65: #{tpu_custom_call.1} parent=55 // pred_check
          %p659 = pneg %p410
        $region66: #{tpu_custom_call.1} parent=55 // pred_check_branch
          %661 = sbr.rel (%p659) target = $region68
        $region67: #{tpu_custom_call.1} parent=55 // pred_region
          %v662 = vld [vmem:[#allocation2] sm:$0xff]
          %v663 = vld [vmem:[#allocation2 + $0x8] sm:$0xff]
          %v664 = vld [vmem:[%s2] sm:$0xff]
          %v665 = vld [vmem:[%s2 + $0x8] sm:$0xff]
          %v666 = vld [vmem:[%s2 + $0x10] sm:$0xff]
          %vm667 = vcmask 7168
          %v669 = vsel %vm667, %v664, 0
          %v672 = vsel %vm667, %v665, 0
          %v675 = vsel %vm667, %v666, 0
          %677 = vmatpush.xpose.msra.mxu0 0.0
          %678 = vmatpush.xpose.msra.mxu0 0.0
          %679 = vmatpush.xpose.msra.mxu0 0.0
          %680 = vmatpush.xpose.msra.mxu0 0.0
          %681 = vmatpush.xpose.msra.mxu0 0.0
          %682 = vmatpush.xpose.msra.mxu0 0.0
          %683 = vmatpush.xpose.msra.mxu0 0.0
          %684 = vmatpush.xpose.msra.mxu0 0.0
          %685 = vmatpush.xpose.msra.mxu0 0.0
          %686 = vmatpush.xpose.msra.mxu0 0.0
          %687 = vmatpush.xpose.msra.mxu0 0.0
          %688 = vmatpush.xpose.msra.mxu0 0.0
          %689 = vmatpush.xpose.msra.mxu0 0.0
          %690 = vmatpush.xpose.msra.mxu0 0.0
          %691 = vmatpush.xpose.msra.mxu0 0.0
          %692 = vmatpush.xpose.msra.mxu0 %v675
          %693 = vmatmul.f32.gmra.mxu0 %v669
          %v694 = vpop.f32.mrf.mxu0
          %v695 = vadd.f32 0.0, %v694
          %696 = vmatmul.f32.gmra.mxu0 %v672
          %v697 = vpop.f32.mrf.mxu0
          %v698 = vadd.f32 0.0, %v697
          %699 = vdwg.mxu0
          %v700 = vmul.f32 %v695, 92.0
          %v701 = vmul.f32 %v698, 92.0
          %v702 = vsub.f32 %v662, %v700
          %v703 = vsub.f32 %v663, %v701
          %v704 = vld [vmem:[%s3] sm:$0xff]
          %v705 = vld [vmem:[%s4] sm:$0x1]
          %v707 = vperm.slane %v705, 0
          %v710 = vsel %vm656, %v702, 0
          %v713 = vsel %vm656, %v703, 0
          %715 = vmatpush.msra.mxu0 0.0
          %716 = vmatpush.msra.mxu0 0.0
          %717 = vmatpush.msra.mxu0 0.0
          %718 = vmatpush.msra.mxu0 0.0
          %719 = vmatpush.msra.mxu0 0.0
          %720 = vmatpush.msra.mxu0 0.0
          %721 = vmatpush.msra.mxu0 0.0
          %722 = vmatpush.msra.mxu0 0.0
          %723 = vmatpush.msra.mxu0 0.0
          %724 = vmatpush.msra.mxu0 0.0
          %725 = vmatpush.msra.mxu0 0.0
          %726 = vmatpush.msra.mxu0 0.0
          %727 = vmatpush.msra.mxu0 0.0
          %728 = vmatpush.msra.mxu0 0.0
          %729 = vmatpush.msra.mxu0 0.0
          %730 = vmatpush.msra.mxu0 %v704
          %731 = vmatmul.f32.gmra.mxu0 %v710
          %v732 = vpop.f32.mrf.mxu0
          %v733 = vadd.f32 %v707, %v732
          %734 = vmatmul.f32.gmra.mxu0 %v713
          %v735 = vpop.f32.mrf.mxu0
          %v736 = vadd.f32 %v707, %v735
          %737 = vdwg.mxu0
          %v738 = vadd.f32 %v733, %v702
          %v739 = vadd.f32 %v736, %v703
          %v740 = vmax.f32 %v738, 0.0
          %v741 = vmax.f32 %v739, 0.0
          %v742 = vld [vmem:[%s5] sm:$0xff]
          %v743 = vld [vmem:[%s5 + $0x8] sm:$0xff]
          %v745 = vsel %vm446, %v742, 0
          %v748 = vsel %vm446, %v743, 0
          %750 = vmatpush.msra.mxu0 0.0
          %751 = vmatpush.msra.mxu0 0.0
          %752 = vmatpush.msra.mxu0 0.0
          %753 = vmatpush.msra.mxu0 0.0
          %754 = vmatpush.msra.mxu0 0.0
          %755 = vmatpush.msra.mxu0 0.0
          %756 = vmatpush.msra.mxu0 0.0
          %757 = vmatpush.msra.mxu0 0.0
          %758 = vmatpush.msra.mxu0 0.0
          %759 = vmatpush.msra.mxu0 0.0
          %760 = vmatpush.msra.mxu0 0.0
          %761 = vmatpush.msra.mxu0 0.0
          %762 = vmatpush.msra.mxu0 0.0
          %763 = vmatpush.msra.mxu0 0.0
          %764 = vmatpush.msra.mxu0 %v741
          %765 = vmatpush.msra.mxu0 %v740
          %766 = vmatmul.f32.gmra.mxu0 %v745
          %v767 = vpop.f32.mrf.mxu0
          %v768 = vadd.f32 0.0, %v767
          %769 = vmatmul.f32.gmra.mxu0 %v748
          %v770 = vpop.f32.mrf.mxu0
          %v771 = vadd.f32 0.0, %v770
          %772 = vdwg.mxu0
          %v773 = vld [vmem:[%s6] sm:$0xff]
          %v774 = vld [vmem:[%s6 + $0x8] sm:$0xff]
          %v776 = vsel %vm446, %v773, 0
          %v779 = vsel %vm446, %v774, 0
          %781 = vmatpush.msra.mxu0 0.0
          %782 = vmatpush.msra.mxu0 0.0
          %783 = vmatpush.msra.mxu0 0.0
          %784 = vmatpush.msra.mxu0 0.0
          %785 = vmatpush.msra.mxu0 0.0
          %786 = vmatpush.msra.mxu0 0.0
          %787 = vmatpush.msra.mxu0 0.0
          %788 = vmatpush.msra.mxu0 0.0
          %789 = vmatpush.msra.mxu0 0.0
          %790 = vmatpush.msra.mxu0 0.0
          %791 = vmatpush.msra.mxu0 0.0
          %792 = vmatpush.msra.mxu0 0.0
          %793 = vmatpush.msra.mxu0 0.0
          %794 = vmatpush.msra.mxu0 0.0
          %795 = vmatpush.msra.mxu0 %v771
          %796 = vmatpush.msra.mxu0 %v768
          %797 = vmatmul.f32.gmra.mxu0 %v776
          %v798 = vpop.f32.mrf.mxu0
          %v799 = vadd.f32 0.0, %v798
          %800 = vmatmul.f32.gmra.mxu0 %v779
          %v801 = vpop.f32.mrf.mxu0
          %v802 = vadd.f32 0.0, %v801
          %803 = vdwg.mxu0
          %v804 = vld [vmem:[%s1 + $0x10] sm:$0xff]
          %v806 = vsel %vm656, %v799, 0
          %v809 = vsel %vm656, %v802, 0
          %811 = vmatpush.msra.mxu0 0.0
          %812 = vmatpush.msra.mxu0 0.0
          %813 = vmatpush.msra.mxu0 0.0
          %814 = vmatpush.msra.mxu0 0.0
          %815 = vmatpush.msra.mxu0 0.0
          %816 = vmatpush.msra.mxu0 0.0
          %817 = vmatpush.msra.mxu0 0.0
          %818 = vmatpush.msra.mxu0 0.0
          %819 = vmatpush.msra.mxu0 0.0
          %820 = vmatpush.msra.mxu0 0.0
          %821 = vmatpush.msra.mxu0 0.0
          %822 = vmatpush.msra.mxu0 0.0
          %823 = vmatpush.msra.mxu0 0.0
          %824 = vmatpush.msra.mxu0 0.0
          %825 = vmatpush.msra.mxu0 0.0
          %826 = vmatpush.msra.mxu0 %v804
          %827 = vmatmul.f32.gmra.mxu0 %v806
          %v828 = vpop.f32.mrf.mxu0
          %v829 = vadd.f32 0.0, %v828
          %830 = vmatmul.f32.gmra.mxu0 %v809
          %v831 = vpop.f32.mrf.mxu0
          %v832 = vadd.f32 0.0, %v831
          %833 = vdwg.mxu0
          %834 = vmatpush.msra.mxu0 0.0
          %835 = vmatpush.msra.mxu0 0.0
          %836 = vmatpush.msra.mxu0 0.0
          %837 = vmatpush.msra.mxu0 0.0
          %838 = vmatpush.msra.mxu0 0.0
          %839 = vmatpush.msra.mxu0 0.0
          %840 = vmatpush.msra.mxu0 0.0
          %841 = vmatpush.msra.mxu0 0.0
          %842 = vmatpush.msra.mxu0 0.0
          %843 = vmatpush.msra.mxu0 0.0
          %844 = vmatpush.msra.mxu0 0.0
          %845 = vmatpush.msra.mxu0 0.0
          %846 = vmatpush.msra.mxu0 0.0
          %847 = vmatpush.msra.mxu0 0.0
          %848 = vmatpush.msra.mxu0 0.0
          %849 = vmatpush.msra.mxu0 %v666
          %850 = vmatmul.f32.gmra.mxu0 %v806
          %v851 = vpop.f32.mrf.mxu0
          %v852 = vadd.f32 0.0, %v851
          %853 = vmatmul.f32.gmra.mxu0 %v809
          %v854 = vpop.f32.mrf.mxu0
          %v855 = vadd.f32 0.0, %v854
          %856 = vdwg.mxu0
          %v857 = vld [vmem:[%s7] sm:$0xff]
          %v858 = vld [vmem:[%s7 + $0x8] sm:$0xff]
          %860 = vset.pattern.permute.xlu0 0
          %861 = vperm.xlu0 %860, %v857
          %v862 = vpop.permute.xlu0 %861
          %865 = vset.pattern.permute.xlu0 0
          %866 = vperm.xlu0 %865, %v858
          %v867 = vpop.permute.xlu0 %866
          %v869 = vmul.f32 %v862, %v829
          %v870 = vmul.f32 %v867, %v832
          %871 = vst.msk [vmem:[%s396] sm:$0xff] %vm446, %v869
          %872 = vst.msk [vmem:[%s396 + $0x8] sm:$0xff] %vm446, %v870
          %v873 = vld [vmem:[%s7] sm:$0xff]
          %v874 = vld [vmem:[%s7 + $0x8] sm:$0xff]
          %v875 = vmul.f32 %v873, %v852
          %v876 = vmul.f32 %v874, %v855
          %v877 = vld [vmem:[%s8] sm:$0xff]
          %v878 = vld [vmem:[%s8 + $0x8] sm:$0xff]
          %v879 = vadd.f32 %v875, %v877
          %v880 = vadd.f32 %v876, %v878
          %881 = vst.msk [vmem:[%s409] sm:$0xff] %vm667, %v879
          %882 = vst.msk [vmem:[%s409 + $0x8] sm:$0xff] %vm667, %v880
        $region68: #{tpu_custom_call.1} parent=55 // pred_fallthru
          _
        %s883 = sand.u32 %s244, 1
        %s884 = scalar_lea.sflag [#allocation5], %s883
        %s885 = sand.u32 %s244, 1
        %s886 = smul.addr %s885, 16
        %s887 = scalar_lea.vmem [#allocation6], %s886
        %p888 = scmp.lt.s32.totalorder %s32, 1
        %s889 = scalar_select %p888, %s32, 1
        %s890 = smul.addr %s889, 2
        %s891 = smul.addr %s890, 8
        %s892 = scalar_lea.vmem %s10, %s891
        // Predicated region
        $region69: #{tpu_custom_call.1} parent=55 // pred_check
          %p893 = pneg %p254
        $region70: #{tpu_custom_call.1} parent=55 // pred_check_branch
          %895 = sbr.rel (%p893) target = $region72
        $region71: #{tpu_custom_call.1} parent=55 // pred_region
          %897 = vsyncadd %s884, 0
          %s898 = smul.addr %s32, 2
          %s899 = smul.addr %s898, 8
          %s900 = scalar_lea.hbm %s9, %s899
          %s901 = sshll.u32 %s887, 4
          %s902 = int_to_ptr.vmem [resolvable:$true] %s901
          %s903 = sshll.u32 %s900, 4
          %s904 = int_to_ptr.hbm [resolvable:$true] %s903
          %909 = dma.vmem_to_hbm [thread:$0]  %s902, 256, %s904, %s884, 128, 128, 8
        $region72: #{tpu_custom_call.1} parent=55 // pred_fallthru
          _
        // Predicated region
        $region73: #{tpu_custom_call.1} parent=55 // pred_check
          %p910 = pneg %p280
        $region74: #{tpu_custom_call.1} parent=55 // pred_check_branch
          %912 = sbr.rel (%p910) target = $region76
        $region75: #{tpu_custom_call.1} parent=55 // pred_region
          _
        $region76: #{tpu_custom_call.1} parent=55 // pred_fallthru
          _
      $region56: #{tpu_custom_call.1} parent=5 // pred_fallthru
        _
      %p913 = scmp.le.s32.totalorder 2, %s23
      // Predicated region
      $region77: #{tpu_custom_call.1} parent=5 // pred_check
        %p914 = pneg %p913
      $region78: #{tpu_custom_call.1} parent=5 // pred_check_branch
        %916 = sbr.rel (%p914) target = $region80
      $region79: #{tpu_custom_call.1} parent=5 // pred_region
        %s917 = ssub.s32 %s23, 2
        // Predicated region
        $region81: #{tpu_custom_call.1} parent=79 // pred_check
          %p918 = pneg %p260
        $region82: #{tpu_custom_call.1} parent=79 // pred_check_branch
          %920 = sbr.rel (%p918) target = $region84
        $region83: #{tpu_custom_call.1} parent=79 // pred_region
          %s921 = sand.u32 %s245, 1
          %s922 = scalar_lea.sflag [#allocation5], %s921
          %s923 = sand.u32 %s245, 1
          %s924 = smul.addr %s923, 16
          %s925 = scalar_lea.vmem [#allocation6], %s924
          %927 = dma.done %s922, 256
        $region84: #{tpu_custom_call.1} parent=79 // pred_fallthru
          _
        // Predicated region
        $region85: #{tpu_custom_call.1} parent=79 // pred_check
          %p928 = pneg %p286
        $region86: #{tpu_custom_call.1} parent=79 // pred_check_branch
          %930 = sbr.rel (%p928) target = $region88
        $region87: #{tpu_custom_call.1} parent=79 // pred_region
          %p931 = scmp.lt.s32.totalorder %s34, 1
          %s932 = scalar_select %p931, %s34, 1
          %s933 = smul.addr %s932, 2
          %s934 = smul.addr %s933, 8
          %s935 = scalar_lea.vmem %s10, %s934
        $region88: #{tpu_custom_call.1} parent=79 // pred_fallthru
          _
      $region80: #{tpu_custom_call.1} parent=5 // pred_fallthru
        _
    $region6: #{tpu_custom_call.1} parent=1 // loop_footer
      %s27 = sadd.s32 1, %s23
    $region7: #{tpu_custom_call.1} parent=1 // loop_footer_branch
      %22 = sbr.rel target = $region3
    $region8: #{tpu_custom_call.1} parent=1 // loop_exit
      _
    %936 = vsyncpa [#allocation4], 1
    %s937 = scalar_lea.sflag [#allocation4], 1
    %938 = vsyncpa %s937, 1
    %939 = vsyncpa [#allocation5], 1
    %s940 = scalar_lea.sflag [#allocation5], 1
    %941 = vsyncpa %s940, 1

</llo_original>
